<compile_context>
chip_gen: v7x
topology: tpu7x:2x2x1
jax: 0.10.0
libtpu: 0.0.40
codegen_flags: <defaults>
</compile_context>

<pallas_src>
import jax
import jax.numpy as jnp
from jax.experimental import pallas as pl
from jax.experimental.pallas import tpu as pltpu


# ----------------------------------------------------------------------------- kernel
def _rot_mlp_kernel(x_ref, w1_ref, b1_ref, w2_ref, b2_ref, w3_ref, b3_ref, o_ref):
    # Whole (row-packed) MLP for one batch tile fused in VMEM: 3 MXU matmuls with
    # bf16 operands and f32 accumulation, VPU bias-add / ReLU.  The f32->bf16 cast
    # of the streamed activation happens here (VPU, hidden under MXU work).
    x = x_ref[...].astype(jnp.bfloat16)                                   # (TBp, obs*g)
    h1 = jnp.dot(x, w1_ref[...], preferred_element_type=jnp.float32) + b1_ref[...]
    h1 = jnp.maximum(h1, 0.0).astype(jnp.bfloat16)
    h2 = jnp.dot(h1, w2_ref[...], preferred_element_type=jnp.float32) + b2_ref[...]
    h2 = jnp.maximum(h2, 0.0).astype(jnp.bfloat16)
    out = jnp.dot(h2, w3_ref[...], preferred_element_type=jnp.float32) + b3_ref[...]
    o_ref[...] = out.astype(o_ref.dtype)


# --------------------------------------------------------------------- weight packing
def _mxu_pack_factor():
    """Batch rows packed per MXU row: 4 on 128-wide MXUs (v2..v5e), 8 on 256-wide."""
    try:
        kind = jax.devices()[0].device_kind.lower()
    except Exception:
        return 4
    return 8 if ("v6" in kind or "v7" in kind) else 4


def _block_diag(w, g):
    """(kin, kout) -> (g*kin, g*kout) with g copies of w on the diagonal."""
    kin, kout = w.shape
    eye = jnp.eye(g, dtype=w.dtype)
    bd = eye[:, :, None, None] * w[None, None, :, :]          # (g, g, kin, kout)
    return bd.transpose(0, 2, 1, 3).reshape(g * kin, g * kout)


def pack_params(params, g=None):
    """One-time weight preparation (call once; do NOT redo per forward call).

    Builds block-diagonal bf16 weights and g-tiled f32 biases so that g
    independent batch rows share one MXU row-push.
    """
    if g is None:
        g = _mxu_pack_factor()
    return {
        "g": int(g),
        "obs_dim": int(params["w1"].shape[0]),
        "hidden_dim": int(params["w1"].shape[1]),
        "out_dim": int(params["w3"].shape[1]),
        "w1": _block_diag(params["w1"], g).astype(jnp.bfloat16),
        "w2": _block_diag(params["w2"], g).astype(jnp.bfloat16),
        "w3": _block_diag(params["w3"], g).astype(jnp.bfloat16),
        "b1": jnp.tile(params["b1"].astype(jnp.float32), (1, g)),
        "b2": jnp.tile(params["b2"].astype(jnp.float32), (1, g)),
        "b3": jnp.tile(params["b3"].astype(jnp.float32), (1, g)),
    }


# -------------------------------------------------------------------------- forward
def rot_function_forward(h, packed_params, *, block_rows=4096):
    """Pallas forward for RotFunction.

    h:             (B, obs_dim) float32
    packed_params: output of pack_params(init_params(...))
    returns:       (B, 4) float32
    """
    p = packed_params
    g, obs_dim, hidden, out_dim = p["g"], p["obs_dim"], p["hidden_dim"], p["out_dim"]
    B = h.shape[0]
    assert h.shape[1] == obs_dim, (h.shape, obs_dim)

    # Pack g batch rows into the lane/contraction dim (free contiguous reshape);
    # pad B up to a multiple of g first (pad rows are discarded at the end).
    B_pad = pl.cdiv(B, g) * g
    if B_pad != B:
        h = jnp.pad(h, ((0, B_pad - B), (0, 0)))
    Bp = B_pad // g
    Kg, Hg, Og = obs_dim * g, hidden * g, out_dim * g
    x = h.reshape(Bp, Kg).astype(jnp.float32)

    # Batch tile (in packed rows).  Big tiles amortize ~0.35us/grid-step overhead;
    # a double-buffered 512x256 f32 x-tile is ~1 MiB, far under any scoped-VMEM
    # limit.  Keep >=2 grid steps when possible so v7x shards the batch axis
    # across both TensorCores.
    sub = 16 if Bp >= 16 else 8
    tbp = max(sub, min(pl.cdiv(block_rows, g), Bp))
    tbp = ((tbp + sub - 1) // sub) * sub
    if Bp > sub and pl.cdiv(Bp, tbp) < 2:
        tbp = ((pl.cdiv(Bp, 2) + sub - 1) // sub) * sub
    grid = (pl.cdiv(Bp, tbp),)

    resident = lambda shape: pl.BlockSpec(shape, lambda i: (0, 0))

    flops = 2 * B_pad * (obs_dim * hidden + hidden * hidden + hidden * out_dim)
    bytes_accessed = (
        x.size * 4                                                # f32 activations in
        + Bp * Og * 4                                             # f32 output
        + (p["w1"].size + p["w2"].size + p["w3"].size) * 2        # bf16 weights, once
        + (p["b1"].size + p["b2"].size + p["b3"].size) * 4)       # f32 biases, once

    out_packed = pl.pallas_call(
        _rot_mlp_kernel,
        out_shape=jax.ShapeDtypeStruct((Bp, Og), jnp.float32),
        grid=grid,
        in_specs=[
            pl.BlockSpec((tbp, Kg), lambda i: (i, 0)),   # x: streamed over batch
            resident((Kg, Hg)),                          # W1 (block-diag, VMEM-resident)
            resident((1, Hg)),                           # b1
            resident((Hg, Hg)),                          # W2
            resident((1, Hg)),                           # b2
            resident((Hg, Og)),                          # W3
            resident((1, Og)),                           # b3
        ],
        out_specs=pl.BlockSpec((tbp, Og), lambda i: (i, 0)),
        compiler_params=pltpu.CompilerParams(
            dimension_semantics=("parallel",)),
        cost_estimate=pl.CostEstimate(
            flops=flops, transcendentals=0, bytes_accessed=bytes_accessed),
    )(x, p["w1"], p["b1"], p["w2"], p["b2"], p["w3"], p["b3"])

    out = out_packed.reshape(B_pad, out_dim)                     # free contiguous reshape
    return out[:B] if B_pad != B else out


# ------------------------------------------------------------------- params / reference
def init_params(key, obs_dim, hidden_dim, out_dim=4):
    """Deterministic synthetic parameters (PyTorch-Linear-like uniform init), f32."""
    ks = jax.random.split(key, 6)

    def lin(kw, kb, fan_in, fan_out):
        bound = 1.0 / jnp.sqrt(fan_in)
        w = jax.random.uniform(kw, (fan_in, fan_out), jnp.float32, -bound, bound)
        b = jax.random.uniform(kb, (1, fan_out), jnp.float32, -bound, bound)
        return w, b

    w1, b1 = lin(ks[0], ks[1], obs_dim, hidden_dim)
    w2, b2 = lin(ks[2], ks[3], hidden_dim, hidden_dim)
    w3, b3 = lin(ks[4], ks[5], hidden_dim, out_dim)
    return {"w1": w1, "b1": b1, "w2": w2, "b2": b2, "w3": w3, "b3": b3}


def _reference_bf16(h, p):
    # Mirrors the kernel's numerics exactly: bf16 operands / intermediates, f32 accum.
    f = lambda a: a.astype(jnp.bfloat16).astype(jnp.float32)
    h1 = f(jnp.maximum(f(h) @ f(p["w1"]) + p["b1"], 0.0))
    h2 = f(jnp.maximum(h1 @ f(p["w2"]) + p["b2"], 0.0))
    return h2 @ f(p["w3"]) + p["b3"]


def _reference_f32(h, p):
    # Faithful f32 version of the PyTorch module.
    h1 = jnp.maximum(h @ p["w1"] + p["b1"], 0.0)
    h2 = jnp.maximum(h1 @ p["w2"] + p["b2"], 0.0)
    return h2 @ p["w3"] + p["b3"]


# ------------------------------------------------------------------------------ main
if __name__ == "__main__":
    key = jax.random.PRNGKey(0)
    k_param, k_x, k_x2 = jax.random.split(key, 3)

    batch, obs_dim, hidden_dim = 256, 32, 32
    params = init_params(k_param, obs_dim, hidden_dim)
    packed = pack_params(params)            # packing factor g auto-selected per chip
    h = jax.random.normal(k_x, (batch, obs_dim), dtype=jnp.float32)

    # Small block so this run exercises a multi-step, double-buffered batch grid.
    out = rot_function_forward(h, packed, block_rows=64)
    out = jax.block_until_ready(out)
    assert out.shape == (batch, 4), out.shape

    ref = _reference_bf16(h, params)
    assert jnp.allclose(out, ref, atol=2e-3, rtol=2e-3), "mismatch vs bf16-mirrored reference"
    # Loose sanity check vs the pure-f32 PyTorch semantics (bf16 operand rounding only).
    ref32 = _reference_f32(h, params)
    assert jnp.allclose(out, ref32, atol=1e-1, rtol=1e-1), "drifted from f32 reference"

    # Ragged batch: exercises pad-to-multiple-of-g + output slice path (default tile).
    h2 = jax.random.normal(k_x2, (batch - 3, obs_dim), dtype=jnp.float32)
    out2 = jax.block_until_ready(rot_function_forward(h2, packed))
    assert out2.shape == (batch - 3, 4), out2.shape
    assert jnp.allclose(out2, _reference_bf16(h2, params), atol=2e-3, rtol=2e-3), \
        "mismatch on ragged batch"

    print("KERNEL_OK")
</pallas_src>

<mosaic_0001>
module attributes {stable_mosaic.version = 11 : i64} {
  func.func @_rot_mlp_kernel(%arg0: i32, %arg1: memref<16x128xf32, #tpu.memory_space<vmem>>, %arg2: memref<128x128xbf16, #tpu.memory_space<vmem>>, %arg3: memref<1x128xf32, #tpu.memory_space<vmem>>, %arg4: memref<128x128xbf16, #tpu.memory_space<vmem>>, %arg5: memref<1x128xf32, #tpu.memory_space<vmem>>, %arg6: memref<128x16xbf16, #tpu.memory_space<vmem>>, %arg7: memref<1x16xf32, #tpu.memory_space<vmem>>, %arg8: memref<16x16xf32, #tpu.memory_space<vmem>>) attributes {dimension_semantics = [#tpu.dimension_semantics<parallel>], iteration_bounds = array<i64: 4>, scalar_prefetch = 0 : i64, scratch_operands = 0 : i64, tpu.core_type = #tpu.core_type<tc>, window_params = [{transform_indices = @transform_0, window_bounds = array<i64: 16, 128>}, {pipeline_mode = #tpu.pipeline_mode<synchronous>, transform_indices = @transform_1, window_bounds = array<i64: 128, 128>}, {pipeline_mode = #tpu.pipeline_mode<synchronous>, transform_indices = @transform_2, window_bounds = array<i64: 1, 128>}, {pipeline_mode = #tpu.pipeline_mode<synchronous>, transform_indices = @transform_3, window_bounds = array<i64: 128, 128>}, {pipeline_mode = #tpu.pipeline_mode<synchronous>, transform_indices = @transform_4, window_bounds = array<i64: 1, 128>}, {pipeline_mode = #tpu.pipeline_mode<synchronous>, transform_indices = @transform_5, window_bounds = array<i64: 128, 16>}, {pipeline_mode = #tpu.pipeline_mode<synchronous>, transform_indices = @transform_6, window_bounds = array<i64: 1, 16>}, {transform_indices = @transform_7, window_bounds = array<i64: 16, 16>}]} {
    %c0 = arith.constant 0 : index
    %c0_0 = arith.constant 0 : index
    %0 = vector.load %arg1[%c0, %c0_0] : memref<16x128xf32, #tpu.memory_space<vmem>>, vector<16x128xf32>
    %1 = arith.truncf %0 : vector<16x128xf32> to vector<16x128xbf16>
    %c0_1 = arith.constant 0 : index
    %c0_2 = arith.constant 0 : index
    %2 = vector.load %arg2[%c0_1, %c0_2] : memref<128x128xbf16, #tpu.memory_space<vmem>>, vector<128x128xbf16>
    %cst = arith.constant dense<0.000000e+00> : vector<16x128xf32>
    %3 = tpu.matmul %1, %2, %cst {dimension_numbers = #tpu.dot_dimension_numbers<[1], [0], [0], [1], [0, 0, 1, 1], [], []>} : vector<16x128xbf16>, vector<128x128xbf16>, vector<16x128xf32> -> vector<16x128xf32>
    %c0_3 = arith.constant 0 : index
    %c0_4 = arith.constant 0 : index
    %4 = vector.load %arg3[%c0_3, %c0_4] : memref<1x128xf32, #tpu.memory_space<vmem>>, vector<1x128xf32>
    %5 = vector.broadcast %4 : vector<1x128xf32> to vector<16x128xf32>
    %6 = arith.addf %3, %5 : vector<16x128xf32>
    %cst_5 = arith.constant 0.000000e+00 : f32
    %7 = vector.broadcast %cst_5 : f32 to vector<16x128xf32>
    %8 = arith.maximumf %6, %7 : vector<16x128xf32>
    %9 = arith.truncf %8 : vector<16x128xf32> to vector<16x128xbf16>
    %c0_6 = arith.constant 0 : index
    %c0_7 = arith.constant 0 : index
    %10 = vector.load %arg4[%c0_6, %c0_7] : memref<128x128xbf16, #tpu.memory_space<vmem>>, vector<128x128xbf16>
    %cst_8 = arith.constant dense<0.000000e+00> : vector<16x128xf32>
    %11 = tpu.matmul %9, %10, %cst_8 {dimension_numbers = #tpu.dot_dimension_numbers<[1], [0], [0], [1], [0, 0, 1, 1], [], []>} : vector<16x128xbf16>, vector<128x128xbf16>, vector<16x128xf32> -> vector<16x128xf32>
    %c0_9 = arith.constant 0 : index
    %c0_10 = arith.constant 0 : index
    %12 = vector.load %arg5[%c0_9, %c0_10] : memref<1x128xf32, #tpu.memory_space<vmem>>, vector<1x128xf32>
    %13 = vector.broadcast %12 : vector<1x128xf32> to vector<16x128xf32>
    %14 = arith.addf %11, %13 : vector<16x128xf32>
    %cst_11 = arith.constant 0.000000e+00 : f32
    %15 = vector.broadcast %cst_11 : f32 to vector<16x128xf32>
    %16 = arith.maximumf %14, %15 : vector<16x128xf32>
    %17 = arith.truncf %16 : vector<16x128xf32> to vector<16x128xbf16>
    %c0_12 = arith.constant 0 : index
    %c0_13 = arith.constant 0 : index
    %18 = vector.load %arg6[%c0_12, %c0_13] : memref<128x16xbf16, #tpu.memory_space<vmem>>, vector<128x16xbf16>
    %cst_14 = arith.constant dense<0.000000e+00> : vector<16x16xf32>
    %19 = tpu.matmul %17, %18, %cst_14 {dimension_numbers = #tpu.dot_dimension_numbers<[1], [0], [0], [1], [0, 0, 1, 1], [], []>} : vector<16x128xbf16>, vector<128x16xbf16>, vector<16x16xf32> -> vector<16x16xf32>
    %c0_15 = arith.constant 0 : index
    %c0_16 = arith.constant 0 : index
    %20 = vector.load %arg7[%c0_15, %c0_16] : memref<1x16xf32, #tpu.memory_space<vmem>>, vector<1x16xf32>
    %21 = vector.broadcast %20 : vector<1x16xf32> to vector<16x16xf32>
    %22 = arith.addf %19, %21 : vector<16x16xf32>
    %c0_17 = arith.constant 0 : index
    %c0_18 = arith.constant 0 : index
    %23 = vector.load %arg8[%c0_17, %c0_18] : memref<16x16xf32, #tpu.memory_space<vmem>>, vector<16x16xf32>
    tpu.vector_store %arg8[%c0_17, %c0_18], %22 {strides = array<i32>} : memref<16x16xf32, #tpu.memory_space<vmem>>, vector<16x16xf32>,
    return
  }
  func.func @transform_0(%arg0: i32) -> (i32, i32) {
    %c0_i32 = arith.constant 0 : i32
    %c0_i32_0 = arith.constant 0 : i32
    return %arg0, %c0_i32 : i32, i32
  }
  func.func @transform_1(%arg0: i32) -> (i32, i32) {
    %c0_i32 = arith.constant 0 : i32
    %c0_i32_0 = arith.constant 0 : i32
    %c0_i32_1 = arith.constant 0 : i32
    return %c0_i32, %c0_i32_0 : i32, i32
  }
  func.func @transform_2(%arg0: i32) -> (i32, i32) {
    %c0_i32 = arith.constant 0 : i32
    %c0_i32_0 = arith.constant 0 : i32
    %c0_i32_1 = arith.constant 0 : i32
    return %c0_i32, %c0_i32_0 : i32, i32
  }
  func.func @transform_3(%arg0: i32) -> (i32, i32) {
    %c0_i32 = arith.constant 0 : i32
    %c0_i32_0 = arith.constant 0 : i32
    %c0_i32_1 = arith.constant 0 : i32
    return %c0_i32, %c0_i32_0 : i32, i32
  }
  func.func @transform_4(%arg0: i32) -> (i32, i32) {
    %c0_i32 = arith.constant 0 : i32
    %c0_i32_0 = arith.constant 0 : i32
    %c0_i32_1 = arith.constant 0 : i32
    return %c0_i32, %c0_i32_0 : i32, i32
  }
  func.func @transform_5(%arg0: i32) -> (i32, i32) {
    %c0_i32 = arith.constant 0 : i32
    %c0_i32_0 = arith.constant 0 : i32
    %c0_i32_1 = arith.constant 0 : i32
    return %c0_i32, %c0_i32_0 : i32, i32
  }
  func.func @transform_6(%arg0: i32) -> (i32, i32) {
    %c0_i32 = arith.constant 0 : i32
    %c0_i32_0 = arith.constant 0 : i32
    %c0_i32_1 = arith.constant 0 : i32
    return %c0_i32, %c0_i32_0 : i32, i32
  }
  func.func @transform_7(%arg0: i32) -> (i32, i32) {
    %c0_i32 = arith.constant 0 : i32
    %c0_i32_0 = arith.constant 0 : i32
    return %arg0, %c0_i32 : i32, i32
  }
}

</mosaic_0001>

<llo_original>
// kernel: tpu_custom_call.1
$region0: #{tpu_custom_call.1}
  #allocation0 [shape = 'u32[]', space=smem, size = 0x4, offset = 0x4, fixed_abs, tag = 'smem constant byte address 0x4 - core index']
  #allocation1 [shape = 'u32[144,128]{1,0:T(1,128)}', space=vmem, size = 0x12000, scoped, tag = 'internal scratch']
  %s0 = inlined_call_operand.vmem [shape: f32[64,128], index: 0, kind: input, shape index: {}]
  %s1 = inlined_call_operand.hbm [shape: bf16[128,128], index: 1, kind: input, shape index: {}]
  %s2 = inlined_call_operand.vmem [shape: f32[1,128], index: 2, kind: input, shape index: {}]
  %s3 = inlined_call_operand.hbm [shape: bf16[128,128], index: 3, kind: input, shape index: {}]
  %s4 = inlined_call_operand.vmem [shape: f32[1,128], index: 4, kind: input, shape index: {}]
  %s5 = inlined_call_operand.vmem [shape: bf16[128,16], index: 5, kind: input, shape index: {}]
  %s6 = inlined_call_operand.vmem [shape: f32[1,16], index: 6, kind: input, shape index: {}]
  %s7 = inlined_call_operand.vmem [shape: f32[64,16], index: 7, kind: output, shape index: {}]
  %s8 = sld [smem:[#allocation0]]
  $region69: #{tpu_custom_call.1} parent=0
    _
  %s10 = ssub.s32 1, %s8
  %s11 = scalar_select 0, %s10, %s8
  $region1: #{tpu_custom_call.1} parent=0
    #allocation2 [shape = 'u8[32768]{0}', space=vmem, size = 0x8000, scoped, tag = 'input window, operand 1, single buffered']
    #allocation3 [shape = 's32[2]{0}', space=sflag, size = 0x8, scoped, tag = 'scoped memory for tpu_custom_call.1']
    #allocation4 [shape = 'u8[32768]{0}', space=vmem, size = 0x8000, scoped, tag = 'input window, operand 3, single buffered']
    #allocation5 [shape = 's32[1]{0}', space=sflag, size = 0x4, scoped, tag = 'scoped memory for tpu_custom_call.1']
    %12 = vsyncpa [#allocation3], 0
    %13 = vsyncpa [#allocation5], 0
    loop: start=0, step=1, limit=6
    $region2: #{tpu_custom_call.1} parent=1 // loop_pre_header
      _
    $region3: #{tpu_custom_call.1} parent=1 // loop_header
      %s15 = sphi 0, %s19
      %p16 = scmp.ge.s32.totalorder %s15, 6
      %s25 = sphi 0, %s27
      %s28 = sphi 0, %s25
      %s29 = sphi 0, %s28
      %s45 = sphi 0, %s29
      %s49 = sphi 0, %s49
      %s51 = sphi 0, %s49
      %s52 = sphi 0, %s51
      %s66 = sphi 0, %s52
      %s70 = sphi 0, %s70
      %s72 = sphi 0, %s70
      %s73 = sphi 0, %s72
      %s87 = sphi 0, %s73
      %s91 = sphi 0, %s91
      %s93 = sphi 0, %s91
      %s94 = sphi 0, %s93
      %s108 = sphi 0, %s94
      %s112 = sphi 0, %s112
      %s114 = sphi 0, %s112
      %s115 = sphi 0, %s114
      %s129 = sphi 0, %s115
      %s133 = sphi 0, %s133
      %s135 = sphi 0, %s133
      %s136 = sphi 0, %s135
      %s150 = sphi 0, %s136
      %s154 = sphi 0, %s154
      %s156 = sphi 0, %s154
      %s157 = sphi 0, %s156
      %s171 = sphi 0, %s157
      %s177 = sphi 0, %s179
      %s180 = sphi 0, %s177
      %s181 = sphi 0, %s180
      %s197 = sphi 0, %s181
    $region4: #{tpu_custom_call.1} parent=1 // loop_header_branch
      %18 = sbr.rel (%p16) target = $region8
    $region5: #{tpu_custom_call.1} parent=1 // loop_body
      %s20 = ssub.s32 %s15, 1
      %s21 = ssub.s32 %s15, 2
      %s22 = sadd.s32 %s15, 1
      %s23 = ssub.s32 %s15, %s22
      %p24 = scmp.eq.s32.totalorder %s23, 0
      %s26 = sadd.s32 %s25, 1
      %s27 = scalar_select %p24, %s25, %s26
      %p30 = pneg %p24
      %p31 = scmp.eq.s32.totalorder %s15, 3
      %p32 = por %p30, %p31
      %p33 = scmp.ne.s32.totalorder %s25, %s28
      %p34 = scmp.eq.s32.totalorder %s15, 0
      %p35 = por %p33, %p34
      %p36 = scmp.ne.s32.totalorder %s25, %s28
      %p37 = scmp.eq.s32.totalorder %s20, 3
      %p38 = por %p36, %p37
      %p39 = scmp.ne.s32.totalorder %s28, %s29
      %p40 = scmp.eq.s32.totalorder %s20, 0
      %p41 = por %p39, %p40
      %p42 = scmp.ne.s32.totalorder %s28, %s29
      %p43 = scmp.eq.s32.totalorder %s21, 3
      %p44 = por %p42, %p43
      %p46 = scmp.ne.s32.totalorder %s29, %s45
      %p47 = scmp.eq.s32.totalorder %s21, 0
      %p48 = por %p46, %p47
      %s50 = sadd.s32 %s49, 1
      %p53 = scmp.eq.s32.totalorder %s15, 3
      %p54 = scmp.ne.s32.totalorder %s49, %s51
      %p55 = scmp.eq.s32.totalorder %s15, 0
      %p56 = por %p54, %p55
      %p57 = scmp.ne.s32.totalorder %s49, %s51
      %p58 = scmp.eq.s32.totalorder %s20, 3
      %p59 = por %p57, %p58
      %p60 = scmp.ne.s32.totalorder %s51, %s52
      %p61 = scmp.eq.s32.totalorder %s20, 0
      %p62 = por %p60, %p61
      %p63 = scmp.ne.s32.totalorder %s51, %s52
      %p64 = scmp.eq.s32.totalorder %s21, 3
      %p65 = por %p63, %p64
      %p67 = scmp.ne.s32.totalorder %s52, %s66
      %p68 = scmp.eq.s32.totalorder %s21, 0
      %p69 = por %p67, %p68
      %s71 = sadd.s32 %s70, 1
      %p74 = scmp.eq.s32.totalorder %s15, 3
      %p75 = scmp.ne.s32.totalorder %s70, %s72
      %p76 = scmp.eq.s32.totalorder %s15, 0
      %p77 = por %p75, %p76
      %p78 = scmp.ne.s32.totalorder %s70, %s72
      %p79 = scmp.eq.s32.totalorder %s20, 3
      %p80 = por %p78, %p79
      %p81 = scmp.ne.s32.totalorder %s72, %s73
      %p82 = scmp.eq.s32.totalorder %s20, 0
      %p83 = por %p81, %p82
      %p84 = scmp.ne.s32.totalorder %s72, %s73
      %p85 = scmp.eq.s32.totalorder %s21, 3
      %p86 = por %p84, %p85
      %p88 = scmp.ne.s32.totalorder %s73, %s87
      %p89 = scmp.eq.s32.totalorder %s21, 0
      %p90 = por %p88, %p89
      %s92 = sadd.s32 %s91, 1
      %p95 = scmp.eq.s32.totalorder %s15, 3
      %p96 = scmp.ne.s32.totalorder %s91, %s93
      %p97 = scmp.eq.s32.totalorder %s15, 0
      %p98 = por %p96, %p97
      %p99 = scmp.ne.s32.totalorder %s91, %s93
      %p100 = scmp.eq.s32.totalorder %s20, 3
      %p101 = por %p99, %p100
      %p102 = scmp.ne.s32.totalorder %s93, %s94
      %p103 = scmp.eq.s32.totalorder %s20, 0
      %p104 = por %p102, %p103
      %p105 = scmp.ne.s32.totalorder %s93, %s94
      %p106 = scmp.eq.s32.totalorder %s21, 3
      %p107 = por %p105, %p106
      %p109 = scmp.ne.s32.totalorder %s94, %s108
      %p110 = scmp.eq.s32.totalorder %s21, 0
      %p111 = por %p109, %p110
      %s113 = sadd.s32 %s112, 1
      %p116 = scmp.eq.s32.totalorder %s15, 3
      %p117 = scmp.ne.s32.totalorder %s112, %s114
      %p118 = scmp.eq.s32.totalorder %s15, 0
      %p119 = por %p117, %p118
      %p120 = scmp.ne.s32.totalorder %s112, %s114
      %p121 = scmp.eq.s32.totalorder %s20, 3
      %p122 = por %p120, %p121
      %p123 = scmp.ne.s32.totalorder %s114, %s115
      %p124 = scmp.eq.s32.totalorder %s20, 0
      %p125 = por %p123, %p124
      %p126 = scmp.ne.s32.totalorder %s114, %s115
      %p127 = scmp.eq.s32.totalorder %s21, 3
      %p128 = por %p126, %p127
      %p130 = scmp.ne.s32.totalorder %s115, %s129
      %p131 = scmp.eq.s32.totalorder %s21, 0
      %p132 = por %p130, %p131
      %s134 = sadd.s32 %s133, 1
      %p137 = scmp.eq.s32.totalorder %s15, 3
      %p138 = scmp.ne.s32.totalorder %s133, %s135
      %p139 = scmp.eq.s32.totalorder %s15, 0
      %p140 = por %p138, %p139
      %p141 = scmp.ne.s32.totalorder %s133, %s135
      %p142 = scmp.eq.s32.totalorder %s20, 3
      %p143 = por %p141, %p142
      %p144 = scmp.ne.s32.totalorder %s135, %s136
      %p145 = scmp.eq.s32.totalorder %s20, 0
      %p146 = por %p144, %p145
      %p147 = scmp.ne.s32.totalorder %s135, %s136
      %p148 = scmp.eq.s32.totalorder %s21, 3
      %p149 = por %p147, %p148
      %p151 = scmp.ne.s32.totalorder %s136, %s150
      %p152 = scmp.eq.s32.totalorder %s21, 0
      %p153 = por %p151, %p152
      %s155 = sadd.s32 %s154, 1
      %p158 = scmp.eq.s32.totalorder %s15, 3
      %p159 = scmp.ne.s32.totalorder %s154, %s156
      %p160 = scmp.eq.s32.totalorder %s15, 0
      %p161 = por %p159, %p160
      %p162 = scmp.ne.s32.totalorder %s154, %s156
      %p163 = scmp.eq.s32.totalorder %s20, 3
      %p164 = por %p162, %p163
      %p165 = scmp.ne.s32.totalorder %s156, %s157
      %p166 = scmp.eq.s32.totalorder %s20, 0
      %p167 = por %p165, %p166
      %p168 = scmp.ne.s32.totalorder %s156, %s157
      %p169 = scmp.eq.s32.totalorder %s21, 3
      %p170 = por %p168, %p169
      %p172 = scmp.ne.s32.totalorder %s157, %s171
      %p173 = scmp.eq.s32.totalorder %s21, 0
      %p174 = por %p172, %p173
      %s175 = ssub.s32 %s15, %s22
      %p176 = scmp.eq.s32.totalorder %s175, 0
      %s178 = sadd.s32 %s177, 1
      %s179 = scalar_select %p176, %s177, %s178
      %p182 = pneg %p176
      %p183 = scmp.eq.s32.totalorder %s15, 3
      %p184 = por %p182, %p183
      %p185 = scmp.ne.s32.totalorder %s177, %s180
      %p186 = scmp.eq.s32.totalorder %s15, 0
      %p187 = por %p185, %p186
      %p188 = scmp.ne.s32.totalorder %s177, %s180
      %p189 = scmp.eq.s32.totalorder %s20, 3
      %p190 = por %p188, %p189
      %p191 = scmp.ne.s32.totalorder %s180, %s181
      %p192 = scmp.eq.s32.totalorder %s20, 0
      %p193 = por %p191, %p192
      %p194 = scmp.ne.s32.totalorder %s180, %s181
      %p195 = scmp.eq.s32.totalorder %s21, 3
      %p196 = por %p194, %p195
      %p198 = scmp.ne.s32.totalorder %s181, %s197
      %p199 = scmp.eq.s32.totalorder %s21, 0
      %p200 = por %p198, %p199
      %p201 = scmp.le.s32.totalorder 1, %s15
      %p202 = scmp.lt.s32.totalorder %s15, 5
      %p203 = pnand %p201, %p202
      %p204 = pneg %p203
      // Predicated region
      $region9: #{tpu_custom_call.1} parent=5 // pred_check
        _
      $region10: #{tpu_custom_call.1} parent=5 // pred_check_branch
        %206 = sbr.rel (%p203) target = $region12
      $region11: #{tpu_custom_call.1} parent=5 // pred_region
        %s207 = ssub.s32 %s15, 1
        // Predicated region
        $region13: #{tpu_custom_call.1} parent=11 // pred_check
          %p208 = pneg %p62
        $region14: #{tpu_custom_call.1} parent=11 // pred_check_branch
          %210 = sbr.rel (%p208) target = $region16
        $region15: #{tpu_custom_call.1} parent=11 // pred_region
          %s212 = ssub.s32 1024, 1024
          %213 = vsyncadd [#allocation3], %s212
          %s214 = sshll.u32 [#allocation2], 4
          %s215 = int_to_ptr.vmem [resolvable:$true] %s214
          %220 = dma.hbm_to_vmem [thread:$0]  %s1, 1024, %s215, [#allocation3], 64, 64, 4
        $region16: #{tpu_custom_call.1} parent=11 // pred_fallthru
          _
        // Predicated region
        $region17: #{tpu_custom_call.1} parent=11 // pred_check
          %p221 = pneg %p83
        $region18: #{tpu_custom_call.1} parent=11 // pred_check_branch
          %223 = sbr.rel (%p221) target = $region20
        $region19: #{tpu_custom_call.1} parent=11 // pred_region
          _
        $region20: #{tpu_custom_call.1} parent=11 // pred_fallthru
          _
        // Predicated region
        $region21: #{tpu_custom_call.1} parent=11 // pred_check
          %p224 = pneg %p104
        $region22: #{tpu_custom_call.1} parent=11 // pred_check_branch
          %226 = sbr.rel (%p224) target = $region24
        $region23: #{tpu_custom_call.1} parent=11 // pred_region
          %s228 = ssub.s32 1024, 1024
          %229 = vsyncadd [#allocation5], %s228
          %s230 = sshll.u32 [#allocation4], 4
          %s231 = int_to_ptr.vmem [resolvable:$true] %s230
          %236 = dma.hbm_to_vmem [thread:$0]  %s3, 1024, %s231, [#allocation5], 64, 64, 4
        $region24: #{tpu_custom_call.1} parent=11 // pred_fallthru
          _
        // Predicated region
        $region25: #{tpu_custom_call.1} parent=11 // pred_check
          %p237 = pneg %p125
        $region26: #{tpu_custom_call.1} parent=11 // pred_check_branch
          %239 = sbr.rel (%p237) target = $region28
        $region27: #{tpu_custom_call.1} parent=11 // pred_region
          _
        $region28: #{tpu_custom_call.1} parent=11 // pred_fallthru
          _
        // Predicated region
        $region29: #{tpu_custom_call.1} parent=11 // pred_check
          %p240 = pneg %p146
        $region30: #{tpu_custom_call.1} parent=11 // pred_check_branch
          %242 = sbr.rel (%p240) target = $region32
        $region31: #{tpu_custom_call.1} parent=11 // pred_region
          _
        $region32: #{tpu_custom_call.1} parent=11 // pred_fallthru
          _
        // Predicated region
        $region33: #{tpu_custom_call.1} parent=11 // pred_check
          %p243 = pneg %p167
        $region34: #{tpu_custom_call.1} parent=11 // pred_check_branch
          %245 = sbr.rel (%p243) target = $region36
        $region35: #{tpu_custom_call.1} parent=11 // pred_region
          _
        $region36: #{tpu_custom_call.1} parent=11 // pred_fallthru
          _
      $region12: #{tpu_custom_call.1} parent=5 // pred_fallthru
        _
      %p246 = scmp.lt.s32.totalorder %s15, 4
      // Predicated region
      $region37: #{tpu_custom_call.1} parent=5 // pred_check
        %p247 = pneg %p246
      $region38: #{tpu_custom_call.1} parent=5 // pred_check_branch
        %249 = sbr.rel (%p247) target = $region40
      $region39: #{tpu_custom_call.1} parent=5 // pred_region
        // Predicated region
        $region41: #{tpu_custom_call.1} parent=39 // pred_check
          %p250 = pneg %p35
        $region42: #{tpu_custom_call.1} parent=39 // pred_check_branch
          %252 = sbr.rel (%p250) target = $region44
        $region43: #{tpu_custom_call.1} parent=39 // pred_region
          %s253 = smul.u32 2, %s15
          %p254 = scmp.lt.s32.totalorder %s253, 7
          %s255 = scalar_select %p254, %s253, 7
          %s256 = smul.addr %s255, 8
          %s257 = scalar_lea.vmem %s0, %s256
          %s258 = smul.u32 2, %s15
        $region44: #{tpu_custom_call.1} parent=39 // pred_fallthru
          _
      $region40: #{tpu_custom_call.1} parent=5 // pred_fallthru
        _
      %p259 = scmp.le.s32.totalorder 1, %s15
      %p260 = scmp.lt.s32.totalorder %s15, 5
      %p261 = pnand %p259, %p260
      %p262 = pneg %p261
      // Predicated region
      $region45: #{tpu_custom_call.1} parent=5 // pred_check
        _
      $region46: #{tpu_custom_call.1} parent=5 // pred_check_branch
        %264 = sbr.rel (%p261) target = $region48
      $region47: #{tpu_custom_call.1} parent=5 // pred_region
        %s265 = ssub.s32 %s15, 1
        // Predicated region
        $region49: #{tpu_custom_call.1} parent=47 // pred_check
          %p266 = pneg %p62
        $region50: #{tpu_custom_call.1} parent=47 // pred_check_branch
          %268 = sbr.rel (%p266) target = $region52
        $region51: #{tpu_custom_call.1} parent=47 // pred_region
          %269 = dma.done [#allocation3], 1024
        $region52: #{tpu_custom_call.1} parent=47 // pred_fallthru
          _
        // Predicated region
        $region53: #{tpu_custom_call.1} parent=47 // pred_check
          %p270 = pneg %p104
        $region54: #{tpu_custom_call.1} parent=47 // pred_check_branch
          %272 = sbr.rel (%p270) target = $region56
        $region55: #{tpu_custom_call.1} parent=47 // pred_region
          %273 = dma.done [#allocation5], 1024
        $region56: #{tpu_custom_call.1} parent=47 // pred_fallthru
          _
        %s274 = smul.u32 2, %s20
        %p275 = scmp.lt.s32.totalorder %s274, 7
        %s276 = scalar_select %p275, %s274, 7
        %s277 = smul.addr %s276, 8
        %s278 = scalar_lea.vmem %s0, %s277
        %p279 = pneg %p41
        %p280 = pneg %p38
        %p281 = pneg %p62
        %p282 = pneg %p59
        %p283 = pneg %p83
        %p284 = pneg %p80
        %p285 = pneg %p104
        %p286 = pneg %p101
        %p287 = pneg %p125
        %p288 = pneg %p122
        %p289 = pneg %p146
        %p290 = pneg %p143
        %p291 = pneg %p167
        %p292 = pneg %p164
        %p293 = pneg %p193
        %p294 = pneg %p190
        %s295 = smul.u32 2, %s20
        %p296 = scmp.lt.s32.totalorder %s295, 7
        %s297 = scalar_select %p296, %s295, 7
        %s298 = smul.addr %s297, 8
        %s299 = scalar_lea.vmem %s7, %s298
        %s300 = smul.u32 2, %s20
        %p301 = scmp.lt.s32.totalorder %s300, 7
        %s302 = scalar_select %p301, %s300, 7
        %s303 = smul.addr %s302, 8
        %s304 = scalar_lea.vmem %s0, %s303
        %s305 = smul.u32 2, %s20
        %s306 = smul.u32 2, %s20
        %p307 = scmp.lt.s32.totalorder %s306, 7
        %s308 = scalar_select %p307, %s306, 7
        %s309 = smul.addr %s308, 8
        %s310 = scalar_lea.vmem %s7, %s309
        %s311 = smul.u32 2, %s20
        %v313 = vld [vmem:[%s304] sm:$0xff]
        %v314 = vld [vmem:[%s304 + $0x8] sm:$0xff]
        %v315 = vpack.c.bf16 %v314, %v313
        %v316 = vld [vmem:[#allocation2] sm:$0xf]
        %v317 = vld [vmem:[#allocation2 + $0x4] sm:$0xf]
        %v318 = vld [vmem:[#allocation2 + $0x8] sm:$0xf]
        %v319 = vld [vmem:[#allocation2 + $0xc] sm:$0xf]
        %v320 = vld [vmem:[#allocation2 + $0x10] sm:$0xf]
        %v321 = vld [vmem:[#allocation2 + $0x14] sm:$0xf]
        %v322 = vld [vmem:[#allocation2 + $0x18] sm:$0xf]
        %v323 = vld [vmem:[#allocation2 + $0x1c] sm:$0xf]
        %v324 = vld [vmem:[#allocation2 + $0x20] sm:$0xf]
        %v325 = vld [vmem:[#allocation2 + $0x24] sm:$0xf]
        %v326 = vld [vmem:[#allocation2 + $0x28] sm:$0xf]
        %v327 = vld [vmem:[#allocation2 + $0x2c] sm:$0xf]
        %v328 = vld [vmem:[#allocation2 + $0x30] sm:$0xf]
        %v329 = vld [vmem:[#allocation2 + $0x34] sm:$0xf]
        %v330 = vld [vmem:[#allocation2 + $0x38] sm:$0xf]
        %v331 = vld [vmem:[#allocation2 + $0x3c] sm:$0xf]
        %v332 = vld [vmem:[%s2] sm:$0x1]
        %v334 = vlaneseq
        %v335 = vshrl.u32 %v334, 7
        %v336 = vsub.s32 0, %v335
        %v337 = vrot.slane %v332, %v336
        %v355 = vunpack.c.l.b16 %v316
        %v356 = vunpack.c.l.b16 %v317
        %v357 = vunpack.c.l.b16 %v318
        %v358 = vunpack.c.l.b16 %v319
        %v359 = vunpack.c.l.b16 %v320
        %v360 = vunpack.c.l.b16 %v321
        %v361 = vunpack.c.l.b16 %v322
        %v362 = vunpack.c.l.b16 %v323
        %v363 = vunpack.c.l.b16 %v324
        %v364 = vunpack.c.l.b16 %v325
        %v365 = vunpack.c.l.b16 %v326
        %v366 = vunpack.c.l.b16 %v327
        %v367 = vunpack.c.l.b16 %v328
        %v368 = vunpack.c.l.b16 %v329
        %v369 = vunpack.c.l.b16 %v330
        %v370 = vunpack.c.l.b16 %v331
        %v371 = vpack.c.b16 %v356, %v355
        %v372 = vpack.c.b16 %v358, %v357
        %v373 = vpack.c.b16 %v360, %v359
        %v374 = vpack.c.b16 %v362, %v361
        %v375 = vpack.c.b16 %v364, %v363
        %v376 = vpack.c.b16 %v366, %v365
        %v377 = vpack.c.b16 %v368, %v367
        %v378 = vpack.c.b16 %v370, %v369
        %387 = vmatprep.subr.bf16.mxu0 0
        %388 = vmatpush1.bf16.msra.mxu0 %v371
        %389 = vmatprep.subr.bf16.mxu0 0
        %390 = vmatpush1.bf16.msra.mxu0 %v372
        %391 = vmatprep.subr.bf16.mxu0 0
        %392 = vmatpush1.bf16.msra.mxu0 %v373
        %393 = vmatprep.subr.bf16.mxu0 0
        %394 = vmatpush1.bf16.msra.mxu0 %v374
        %395 = vmatprep.subr.bf16.mxu0 0
        %396 = vmatpush1.bf16.msra.mxu0 %v375
        %397 = vmatprep.subr.bf16.mxu0 0
        %398 = vmatpush1.bf16.msra.mxu0 %v376
        %399 = vmatprep.subr.bf16.mxu0 0
        %400 = vmatpush1.bf16.msra.mxu0 %v377
        %401 = vmatprep.subr.bf16.mxu0 0
        %402 = vmatpush1.bf16.msra.mxu0 %v378
        %403 = vmatprep.subr.bf16.mxu0 0
        %404 = vmatpush1.bf16.msra.mxu0 0
        %405 = vmatprep.subr.bf16.mxu0 0
        %406 = vmatpush1.bf16.msra.mxu0 0
        %407 = vmatprep.subr.bf16.mxu0 0
        %408 = vmatpush1.bf16.msra.mxu0 0
        %409 = vmatprep.subr.bf16.mxu0 0
        %410 = vmatpush1.bf16.msra.mxu0 0
        %411 = vmatprep.subr.bf16.mxu0 0
        %412 = vmatpush1.bf16.msra.mxu0 0
        %413 = vmatprep.subr.bf16.mxu0 0
        %414 = vmatpush1.bf16.msra.mxu0 0
        %415 = vmatprep.subr.bf16.mxu0 0
        %416 = vmatpush1.bf16.msra.mxu0 0
        %417 = vmatprep.subr.bf16.mxu0 0
        %418 = vmatpush1.bf16.msra.mxu0 0
        %419 = vmatprep.mubr.bf16.mxu0 0
        %420 = vmatmul.mubr.bf16.gmra.mrb[0].mxu0 %v315
        %v421 = vpop.f32.mrb[0].mxu0
        %v422 = vadd.f32 %v337, %v421
        %v423 = vpop.f32.mrb[0].mxu0
        %v424 = vpop.f32.mrb[0].mxu0
        %v425 = vadd.f32 %v337, %v424
        %v426 = vpop.f32.mrb[0].mxu0
        %427 = vdwg.mxu0
        %v428 = vmax.f32 %v422, 0.0
        %v429 = vmax.f32 %v425, 0.0
        %v430 = vpack.c.bf16 %v429, %v428
        %v431 = vld [vmem:[#allocation4] sm:$0xf]
        %v432 = vld [vmem:[#allocation4 + $0x4] sm:$0xf]
        %v433 = vld [vmem:[#allocation4 + $0x8] sm:$0xf]
        %v434 = vld [vmem:[#allocation4 + $0xc] sm:$0xf]
        %v435 = vld [vmem:[#allocation4 + $0x10] sm:$0xf]
        %v436 = vld [vmem:[#allocation4 + $0x14] sm:$0xf]
        %v437 = vld [vmem:[#allocation4 + $0x18] sm:$0xf]
        %v438 = vld [vmem:[#allocation4 + $0x1c] sm:$0xf]
        %v439 = vld [vmem:[#allocation4 + $0x20] sm:$0xf]
        %v440 = vld [vmem:[#allocation4 + $0x24] sm:$0xf]
        %v441 = vld [vmem:[#allocation4 + $0x28] sm:$0xf]
        %v442 = vld [vmem:[#allocation4 + $0x2c] sm:$0xf]
        %v443 = vld [vmem:[#allocation4 + $0x30] sm:$0xf]
        %v444 = vld [vmem:[#allocation4 + $0x34] sm:$0xf]
        %v445 = vld [vmem:[#allocation4 + $0x38] sm:$0xf]
        %v446 = vld [vmem:[#allocation4 + $0x3c] sm:$0xf]
        %v447 = vld [vmem:[%s4] sm:$0x1]
        %v449 = vlaneseq
        %v450 = vshrl.u32 %v449, 7
        %v451 = vsub.s32 0, %v450
        %v452 = vrot.slane %v447, %v451
        %v470 = vunpack.c.l.b16 %v431
        %v471 = vunpack.c.l.b16 %v432
        %v472 = vunpack.c.l.b16 %v433
        %v473 = vunpack.c.l.b16 %v434
        %v474 = vunpack.c.l.b16 %v435
        %v475 = vunpack.c.l.b16 %v436
        %v476 = vunpack.c.l.b16 %v437
        %v477 = vunpack.c.l.b16 %v438
        %v478 = vunpack.c.l.b16 %v439
        %v479 = vunpack.c.l.b16 %v440
        %v480 = vunpack.c.l.b16 %v441
        %v481 = vunpack.c.l.b16 %v442
        %v482 = vunpack.c.l.b16 %v443
        %v483 = vunpack.c.l.b16 %v444
        %v484 = vunpack.c.l.b16 %v445
        %v485 = vunpack.c.l.b16 %v446
        %v486 = vpack.c.b16 %v471, %v470
        %v487 = vpack.c.b16 %v473, %v472
        %v488 = vpack.c.b16 %v475, %v474
        %v489 = vpack.c.b16 %v477, %v476
        %v490 = vpack.c.b16 %v479, %v478
        %v491 = vpack.c.b16 %v481, %v480
        %v492 = vpack.c.b16 %v483, %v482
        %v493 = vpack.c.b16 %v485, %v484
        %502 = vmatprep.subr.bf16.mxu0 0
        %503 = vmatpush1.bf16.msra.mxu0 %v486
        %504 = vmatprep.subr.bf16.mxu0 0
        %505 = vmatpush1.bf16.msra.mxu0 %v487
        %506 = vmatprep.subr.bf16.mxu0 0
        %507 = vmatpush1.bf16.msra.mxu0 %v488
        %508 = vmatprep.subr.bf16.mxu0 0
        %509 = vmatpush1.bf16.msra.mxu0 %v489
        %510 = vmatprep.subr.bf16.mxu0 0
        %511 = vmatpush1.bf16.msra.mxu0 %v490
        %512 = vmatprep.subr.bf16.mxu0 0
        %513 = vmatpush1.bf16.msra.mxu0 %v491
        %514 = vmatprep.subr.bf16.mxu0 0
        %515 = vmatpush1.bf16.msra.mxu0 %v492
        %516 = vmatprep.subr.bf16.mxu0 0
        %517 = vmatpush1.bf16.msra.mxu0 %v493
        %518 = vmatprep.subr.bf16.mxu0 0
        %519 = vmatpush1.bf16.msra.mxu0 0
        %520 = vmatprep.subr.bf16.mxu0 0
        %521 = vmatpush1.bf16.msra.mxu0 0
        %522 = vmatprep.subr.bf16.mxu0 0
        %523 = vmatpush1.bf16.msra.mxu0 0
        %524 = vmatprep.subr.bf16.mxu0 0
        %525 = vmatpush1.bf16.msra.mxu0 0
        %526 = vmatprep.subr.bf16.mxu0 0
        %527 = vmatpush1.bf16.msra.mxu0 0
        %528 = vmatprep.subr.bf16.mxu0 0
        %529 = vmatpush1.bf16.msra.mxu0 0
        %530 = vmatprep.subr.bf16.mxu0 0
        %531 = vmatpush1.bf16.msra.mxu0 0
        %532 = vmatprep.subr.bf16.mxu0 0
        %533 = vmatpush1.bf16.msra.mxu0 0
        %534 = vmatprep.mubr.bf16.mxu0 0
        %535 = vmatmul.mubr.bf16.gmra.mrb[0].mxu0 %v430
        %v536 = vpop.f32.mrb[0].mxu0
        %v537 = vadd.f32 %v452, %v536
        %v538 = vpop.f32.mrb[0].mxu0
        %v539 = vpop.f32.mrb[0].mxu0
        %v540 = vadd.f32 %v452, %v539
        %v541 = vpop.f32.mrb[0].mxu0
        %542 = vdwg.mxu0
        %v543 = vmax.f32 %v537, 0.0
        %v544 = vmax.f32 %v540, 0.0
        %v545 = vpack.c.bf16 %v544, %v543
        %v546 = vld [vmem:[%s5] sm:$0xf]
        %v547 = vld [vmem:[%s5 + $0x4] sm:$0xf]
        %v548 = vld [vmem:[%s5 + $0x8] sm:$0xf]
        %v549 = vld [vmem:[%s5 + $0xc] sm:$0xf]
        %v550 = vld [vmem:[%s5 + $0x10] sm:$0xf]
        %v551 = vld [vmem:[%s5 + $0x14] sm:$0xf]
        %v552 = vld [vmem:[%s5 + $0x18] sm:$0xf]
        %v553 = vld [vmem:[%s5 + $0x1c] sm:$0xf]
        %v554 = vld [vmem:[%s5 + $0x20] sm:$0xf]
        %v555 = vld [vmem:[%s5 + $0x24] sm:$0xf]
        %v556 = vld [vmem:[%s5 + $0x28] sm:$0xf]
        %v557 = vld [vmem:[%s5 + $0x2c] sm:$0xf]
        %v558 = vld [vmem:[%s5 + $0x30] sm:$0xf]
        %v559 = vld [vmem:[%s5 + $0x34] sm:$0xf]
        %v560 = vld [vmem:[%s5 + $0x38] sm:$0xf]
        %v561 = vld [vmem:[%s5 + $0x3c] sm:$0xf]
        %v562 = vld [vmem:[%s6] sm:$0x1]
        %v564 = vlaneseq
        %v565 = vshrl.u32 %v564, 7
        %v566 = vsub.s32 0, %v565
        %v567 = vrot.slane %v562, %v566
        %v585 = vunpack.c.l.b16 %v546
        %v586 = vunpack.c.l.b16 %v547
        %v587 = vunpack.c.l.b16 %v548
        %v588 = vunpack.c.l.b16 %v549
        %v589 = vunpack.c.l.b16 %v550
        %v590 = vunpack.c.l.b16 %v551
        %v591 = vunpack.c.l.b16 %v552
        %v592 = vunpack.c.l.b16 %v553
        %v593 = vunpack.c.l.b16 %v554
        %v594 = vunpack.c.l.b16 %v555
        %v595 = vunpack.c.l.b16 %v556
        %v596 = vunpack.c.l.b16 %v557
        %v597 = vunpack.c.l.b16 %v558
        %v598 = vunpack.c.l.b16 %v559
        %v599 = vunpack.c.l.b16 %v560
        %v600 = vunpack.c.l.b16 %v561
        %v601 = vpack.c.b16 %v586, %v585
        %v602 = vpack.c.b16 %v588, %v587
        %v603 = vpack.c.b16 %v590, %v589
        %v604 = vpack.c.b16 %v592, %v591
        %v605 = vpack.c.b16 %v594, %v593
        %v606 = vpack.c.b16 %v596, %v595
        %v607 = vpack.c.b16 %v598, %v597
        %v608 = vpack.c.b16 %v600, %v599
        %617 = vmatprep.subr.bf16.mxu0 0
        %618 = vmatpush1.bf16.msra.mxu0 %v601
        %619 = vmatprep.subr.bf16.mxu0 0
        %620 = vmatpush1.bf16.msra.mxu0 %v602
        %621 = vmatprep.subr.bf16.mxu0 0
        %622 = vmatpush1.bf16.msra.mxu0 %v603
        %623 = vmatprep.subr.bf16.mxu0 0
        %624 = vmatpush1.bf16.msra.mxu0 %v604
        %625 = vmatprep.subr.bf16.mxu0 0
        %626 = vmatpush1.bf16.msra.mxu0 %v605
        %627 = vmatprep.subr.bf16.mxu0 0
        %628 = vmatpush1.bf16.msra.mxu0 %v606
        %629 = vmatprep.subr.bf16.mxu0 0
        %630 = vmatpush1.bf16.msra.mxu0 %v607
        %631 = vmatprep.subr.bf16.mxu0 0
        %632 = vmatpush1.bf16.msra.mxu0 %v608
        %633 = vmatprep.subr.bf16.mxu0 0
        %634 = vmatpush1.bf16.msra.mxu0 0
        %635 = vmatprep.subr.bf16.mxu0 0
        %636 = vmatpush1.bf16.msra.mxu0 0
        %637 = vmatprep.subr.bf16.mxu0 0
        %638 = vmatpush1.bf16.msra.mxu0 0
        %639 = vmatprep.subr.bf16.mxu0 0
        %640 = vmatpush1.bf16.msra.mxu0 0
        %641 = vmatprep.subr.bf16.mxu0 0
        %642 = vmatpush1.bf16.msra.mxu0 0
        %643 = vmatprep.subr.bf16.mxu0 0
        %644 = vmatpush1.bf16.msra.mxu0 0
        %645 = vmatprep.subr.bf16.mxu0 0
        %646 = vmatpush1.bf16.msra.mxu0 0
        %647 = vmatprep.subr.bf16.mxu0 0
        %648 = vmatpush1.bf16.msra.mxu0 0
        %649 = vmatprep.mubr.bf16.mxu0 0
        %650 = vmatmul.mubr.bf16.gmra.mrb[0].mxu0 %v545
        %v651 = vpop.f32.mrb[0].mxu0
        %v652 = vadd.f32 %v567, %v651
        %v653 = vpop.f32.mrb[0].mxu0
        %v654 = vpop.f32.mrb[0].mxu0
        %v655 = vadd.f32 %v567, %v654
        %v656 = vpop.f32.mrb[0].mxu0
        %657 = vdwg.mxu0
        %vm658 = vcmask 130048
        %659 = vst.msk [vmem:[%s310] sm:$0xff] %vm658, %v652
        %660 = vst.msk [vmem:[%s310 + $0x8] sm:$0xff] %vm658, %v655
        %s661 = smul.u32 2, %s20
        %p662 = scmp.lt.s32.totalorder %s661, 7
        %s663 = scalar_select %p662, %s661, 7
        %s664 = smul.addr %s663, 8
        %s665 = scalar_lea.vmem %s7, %s664
        // Predicated region
        $region57: #{tpu_custom_call.1} parent=47 // pred_check
          %p666 = pneg %p190
        $region58: #{tpu_custom_call.1} parent=47 // pred_check_branch
          %668 = sbr.rel (%p666) target = $region60
        $region59: #{tpu_custom_call.1} parent=47 // pred_region
          %s669 = smul.u32 2, %s20
        $region60: #{tpu_custom_call.1} parent=47 // pred_fallthru
          _
      $region48: #{tpu_custom_call.1} parent=5 // pred_fallthru
        _
      %p670 = scmp.le.s32.totalorder 2, %s15
      // Predicated region
      $region61: #{tpu_custom_call.1} parent=5 // pred_check
        %p671 = pneg %p670
      $region62: #{tpu_custom_call.1} parent=5 // pred_check_branch
        %673 = sbr.rel (%p671) target = $region64
      $region63: #{tpu_custom_call.1} parent=5 // pred_region
        %s674 = ssub.s32 %s15, 2
        // Predicated region
        $region65: #{tpu_custom_call.1} parent=63 // pred_check
          %p675 = pneg %p196
        $region66: #{tpu_custom_call.1} parent=63 // pred_check_branch
          %677 = sbr.rel (%p675) target = $region68
        $region67: #{tpu_custom_call.1} parent=63 // pred_region
          %s678 = smul.u32 2, %s21
          %p679 = scmp.lt.s32.totalorder %s678, 7
          %s680 = scalar_select %p679, %s678, 7
          %s681 = smul.addr %s680, 8
          %s682 = scalar_lea.vmem %s7, %s681
        $region68: #{tpu_custom_call.1} parent=63 // pred_fallthru
          _
      $region64: #{tpu_custom_call.1} parent=5 // pred_fallthru
        _
    $region6: #{tpu_custom_call.1} parent=1 // loop_footer
      %s19 = sadd.s32 1, %s15
    $region7: #{tpu_custom_call.1} parent=1 // loop_footer_branch
      %14 = sbr.rel target = $region3
    $region8: #{tpu_custom_call.1} parent=1 // loop_exit
      _
    %683 = vsyncpa [#allocation3], 1
    %s684 = scalar_lea.sflag [#allocation3], 1
    %685 = vsyncpa %s684, 1
    %686 = vsyncpa [#allocation5], 1

</llo_original>
